<compile_context>
chip_gen: v7x
topology: tpu7x:2x2x1
jax: 0.10.0
libtpu: 0.0.40
codegen_flags: <defaults>
</compile_context>

<pallas_src>
import functools

import jax
import jax.numpy as jnp
from jax.experimental import pallas as pl
from jax.experimental.pallas import tpu as pltpu


# --------------------------------------------------------------------------
# Kernel
# --------------------------------------------------------------------------
def _se_kernel(x_ref, w1p_ref, w2t_ref, exp_ref, o_ref, *, scale_in_f32):
    # x_ref   : (tb, C*L)  lane-dense input tile (native dtype)
    # w1p_ref : (C*L, H)   first Linear with the mean-pool folded in
    # w2t_ref : (H, C)     second Linear, transposed
    # exp_ref : (C, C*L)   0/1 expand matrix (broadcasts the scale over L)
    x = x_ref[...]
    w1p = w1p_ref[...]
    w2t = w2t_ref[...]
    exp = exp_ref[...]

    # squeeze + first Linear (pooling folded into the weights) -> (tb, H)
    h = jnp.dot(x, w1p, preferred_element_type=jnp.float32)
    h = jnp.maximum(h, 0.0)

    # second Linear + sigmoid -> per-channel scale (tb, C)
    s = jax.nn.sigmoid(
        jnp.dot(h.astype(w2t.dtype), w2t, preferred_element_type=jnp.float32))

    # broadcast the scale over L on the lane axis -> (tb, C*L).
    # NOTE: s_full is a tile-shaped f32 intermediate; it IS accounted for in
    # the VMEM budget used to pick the batch tile size in se_apply().
    s_full = jnp.dot(s.astype(exp.dtype), exp,
                     preferred_element_type=jnp.float32)

    if scale_in_f32:
        # f32 inputs, or bf16 on v5e (no bf16 VALU): multiply in f32, cast once
        # at the store.
        o_ref[...] = (x.astype(jnp.float32) * s_full).astype(o_ref.dtype)
    else:
        # bf16 inputs on v6e/v7x: native bf16 multiply.
        o_ref[...] = (x * s_full.astype(x.dtype)).astype(o_ref.dtype)


# --------------------------------------------------------------------------
# Hardware queries (best-effort, with conservative fallbacks)
# --------------------------------------------------------------------------
def _device_kind():
    try:
        return jax.devices()[0].device_kind.lower()
    except Exception:
        return ""


def _vmem_capacity_bytes():
    try:
        return int(pltpu.get_tpu_info().vmem_capacity_bytes)
    except Exception:
        pass
    kind = _device_kind()
    if any(t in kind for t in ("v4", "v5", "v6")):
        return 128 << 20
    return 64 << 20          # conservative default (v7x per-TensorCore)


# --------------------------------------------------------------------------
# One-time weight preprocessing (hoisted out of the per-call path)
# --------------------------------------------------------------------------
def se_prepare(w1, w2, L, x_dtype=jnp.float32):
    """Build (w1p, w2t, expand) once; reuse across se_apply calls.

    w1: (C//r, C)  first  nn.Linear weight (PyTorch (out, in) layout, no bias)
    w2: (C, C//r)  second nn.Linear weight (PyTorch (out, in) layout, no bias)
    """
    H, C = w1.shape
    x_dtype = jnp.dtype(x_dtype)
    # Keep weights in the input dtype for bf16 (native MXU, half the resident
    # VMEM); everything else stays f32. The expand matrix is exact 0/1 either
    # way, and matmuls still accumulate in f32 via preferred_element_type.
    wdt = jnp.bfloat16 if x_dtype == jnp.bfloat16 else jnp.float32

    # Fold mean-over-L into the first Linear: mean(x,-1) @ w1.T == x2 @ w1p
    w1p = (jnp.repeat(jnp.transpose(w1).astype(jnp.float32), L, axis=0)
           / jnp.float32(L)).astype(wdt)                          # (C*L, H)
    w2t = jnp.transpose(w2).astype(wdt)                           # (H, C)
    # expand[c, c*L + l] = 1 : broadcasts the (B, C) scale over L lanes.
    expand = jnp.repeat(jnp.eye(C, dtype=wdt), L, axis=1)         # (C, C*L)
    return w1p, w2t, expand


# --------------------------------------------------------------------------
# Forward
# --------------------------------------------------------------------------
def se_apply(x, params, *, block_b=None):
    """SEBlock forward from preprocessed params (see se_prepare)."""
    w1p, w2t, expand = params
    B, C, L = x.shape
    CL = C * L
    H = w1p.shape[1]
    itemsize = jnp.dtype(x.dtype).itemsize
    w_itemsize = jnp.dtype(w1p.dtype).itemsize

    # Out of the expand-matmul design regime (expand matrix too big for VMEM):
    # plain-JAX fallback keeps correctness.
    # TODO(synk): two-pass (L-tiled reduce + L-tiled scale) Pallas kernel here.
    if expand.size * w_itemsize > (16 << 20):
        x2 = x.reshape(B, CL).astype(jnp.float32)
        h = jnp.maximum(x2 @ w1p.astype(jnp.float32), 0.0)
        s = jax.nn.sigmoid(h @ w2t.astype(jnp.float32))
        return (x * s.astype(x.dtype)[:, :, None]).astype(x.dtype)

    x2 = x.reshape(B, CL)                                  # lane-dense view

    # ---- generation-aware tiling ------------------------------------------
    kind = _device_kind()
    # v5e and older have no bf16 VALU; keep the final multiply in f32 there.
    scale_in_f32 = (jnp.dtype(x.dtype) == jnp.float32) or any(
        t in kind for t in ("v2", "v3", "v4", "v5"))

    # dtype-dependent sublane multiple (f32: 8, bf16/f16: 16, int8/fp8: 32)
    sub = {4: 8, 2: 16, 1: 32}.get(itemsize, 8)

    vmem_cap = _vmem_capacity_bytes()
    big_vmem = vmem_cap >= (100 << 20)                     # v4/v5/v6: 128 MiB
    vmem_limit = (80 << 20) if big_vmem else (56 << 20)    # v7x: 64 MiB/TC
    slab_target = (12 << 20) if big_vmem else (6 << 20)    # target x-block size

    # Resident weight bytes (worst case: double-buffered if Buffered(1) is
    # unavailable on this jax version).
    w_bytes = 2 * (w1p.size + w2t.size + expand.size) * w_itemsize
    # Per-row working set: 2x streamed in + 2x streamed out + f32 s_full
    # (+ one f32 upcast of x when scaling in f32 on sub-f32 inputs).
    row_ws = 4 * CL * itemsize + CL * 4
    if scale_in_f32 and itemsize < 4:
        row_ws += CL * 4

    if block_b is None:
        if B <= sub:
            block_b = B                                    # full-dim block
        else:
            rows = max(sub, (slab_target // max(CL * itemsize, 1)) // sub * sub)
            budget = int(vmem_limit * 0.85) - w_bytes
            if budget > 0:
                rows = min(rows,
                           max(sub, (budget // max(row_ws, 1)) // sub * sub))
            # Guarantee >= 2 grid steps so both v7x TensorCores get work on
            # the "parallel" batch axis.
            half = ((-(-B // 2)) + sub - 1) // sub * sub   # round_up(cdiv(B,2))
            block_b = min(rows, half)

    grid = (pl.cdiv(B, block_b),)
    kernel = functools.partial(_se_kernel, scale_in_f32=scale_in_f32)

    cost = pl.CostEstimate(
        flops=2 * B * CL * H + 2 * B * H * C + 2 * B * C * CL + B * CL,
        transcendentals=B * C,
        bytes_accessed=(2 * B * CL * itemsize
                        + (w1p.size + w2t.size + expand.size) * w_itemsize),
    )

    def build(single_buffer_weights):
        if single_buffer_weights:
            def wspec(shape):
                return pl.BlockSpec(shape, lambda i: (0, 0),
                                    pipeline_mode=pl.Buffered(1))
        else:
            def wspec(shape):
                return pl.BlockSpec(shape, lambda i: (0, 0))
        return pl.pallas_call(
            kernel,
            out_shape=jax.ShapeDtypeStruct((B, CL), x.dtype),
            grid_spec=pltpu.PrefetchScalarGridSpec(
                num_scalar_prefetch=0,
                grid=grid,
                in_specs=[
                    pl.BlockSpec((block_b, CL), lambda i: (i, 0)),  # streamed x
                    wspec((CL, H)),                                 # resident
                    wspec((H, C)),
                    wspec((C, CL)),
                ],
                out_specs=pl.BlockSpec((block_b, CL), lambda i: (i, 0)),
            ),
            compiler_params=pltpu.CompilerParams(
                dimension_semantics=("parallel",),   # split batch over TCs
                vmem_limit_bytes=vmem_limit,
            ),
            cost_estimate=cost,
        )

    try:
        out2 = build(True)(x2, w1p, w2t, expand)
    except Exception:
        # pipeline_mode=pl.Buffered(1) unsupported -> default double-buffered
        # weight specs (tiny VMEM cost at these weight sizes).
        out2 = build(False)(x2, w1p, w2t, expand)

    return out2.reshape(B, C, L)


def se_block(x, w1, w2, *, block_b=None):
    """Convenience wrapper. For repeated calls, hoist se_prepare and reuse."""
    params = se_prepare(w1, w2, x.shape[-1], x.dtype)
    return se_apply(x, params, block_b=block_b)


def se_block_ref(x, w1, w2):
    """Pure-JAX reference matching the PyTorch forward."""
    y = jnp.mean(x, axis=-1)                       # (B, C)
    h = jnp.maximum(y @ w1.T, 0.0)                 # (B, H)
    s = jax.nn.sigmoid(h @ w2.T)                   # (B, C)
    return x * s[:, :, None]


if __name__ == "__main__":
    # Module config: channel=32, reduction=16 -> hidden=2
    B, C, L = 2, 32, 16
    reduction = 16
    H = C // reduction

    key = jax.random.PRNGKey(0)
    kx, k1, k2 = jax.random.split(key, 3)

    x = jax.random.normal(kx, (B, C, L), dtype=jnp.float32)
    # Deterministic synthetic weights (bias-free Linears, PyTorch (out,in)).
    bound1 = 1.0 / (C ** 0.5)
    bound2 = 1.0 / (H ** 0.5)
    w1 = jax.random.uniform(k1, (H, C), minval=-bound1, maxval=bound1,
                            dtype=jnp.float32)
    w2 = jax.random.uniform(k2, (C, H), minval=-bound2, maxval=bound2,
                            dtype=jnp.float32)

    # Weight prep hoisted out of the hot path: build once, reuse.
    params = se_prepare(w1, w2, L, x.dtype)
    out = jax.block_until_ready(se_apply(x, params))
    ref = jax.block_until_ready(se_block_ref(x, w1, w2))

    assert out.shape == (B, C, L)
    assert jnp.allclose(out, ref, atol=1e-4, rtol=1e-4), "mismatch vs reference"
    print("KERNEL_OK")
</pallas_src>

<mosaic_0001>
module attributes {stable_mosaic.version = 11 : i64} {
  func.func @_se_kernel(%arg0: i32, %arg1: memref<2x512xf32, #tpu.memory_space<vmem>>, %arg2: memref<512x2xf32, #tpu.memory_space<vmem>>, %arg3: memref<2x32xf32, #tpu.memory_space<vmem>>, %arg4: memref<32x512xf32, #tpu.memory_space<vmem>>, %arg5: memref<2x512xf32, #tpu.memory_space<vmem>>) attributes {dimension_semantics = [#tpu.dimension_semantics<parallel>], iteration_bounds = array<i64: 1>, scalar_prefetch = 0 : i64, scratch_operands = 0 : i64, tpu.core_type = #tpu.core_type<tc>, window_params = [{transform_indices = @transform_0, window_bounds = array<i64: 2, 512>}, {pipeline_mode = #tpu.pipeline_mode<synchronous>, transform_indices = @transform_1, window_bounds = array<i64: 512, 2>}, {pipeline_mode = #tpu.pipeline_mode<synchronous>, transform_indices = @transform_2, window_bounds = array<i64: 2, 32>}, {pipeline_mode = #tpu.pipeline_mode<synchronous>, transform_indices = @transform_3, window_bounds = array<i64: 32, 512>}, {transform_indices = @transform_4, window_bounds = array<i64: 2, 512>}]} {
    %c0 = arith.constant 0 : index
    %c0_0 = arith.constant 0 : index
    %0 = vector.load %arg1[%c0, %c0_0] : memref<2x512xf32, #tpu.memory_space<vmem>>, vector<2x512xf32>
    %c0_1 = arith.constant 0 : index
    %c0_2 = arith.constant 0 : index
    %1 = vector.load %arg2[%c0_1, %c0_2] : memref<512x2xf32, #tpu.memory_space<vmem>>, vector<512x2xf32>
    %c0_3 = arith.constant 0 : index
    %c0_4 = arith.constant 0 : index
    %2 = vector.load %arg3[%c0_3, %c0_4] : memref<2x32xf32, #tpu.memory_space<vmem>>, vector<2x32xf32>
    %c0_5 = arith.constant 0 : index
    %c0_6 = arith.constant 0 : index
    %3 = vector.load %arg4[%c0_5, %c0_6] : memref<32x512xf32, #tpu.memory_space<vmem>>, vector<32x512xf32>
    %cst = arith.constant dense<0.000000e+00> : vector<2x2xf32>
    %4 = tpu.matmul %0, %1, %cst {dimension_numbers = #tpu.dot_dimension_numbers<[1], [0], [0], [1], [0, 0, 1, 1], [], []>} : vector<2x512xf32>, vector<512x2xf32>, vector<2x2xf32> -> vector<2x2xf32>
    %cst_7 = arith.constant 0.000000e+00 : f32
    %5 = vector.broadcast %cst_7 : f32 to vector<2x2xf32>
    %6 = arith.maximumf %4, %5 : vector<2x2xf32>
    %cst_8 = arith.constant dense<0.000000e+00> : vector<2x32xf32>
    %7 = tpu.matmul %6, %2, %cst_8 {dimension_numbers = #tpu.dot_dimension_numbers<[1], [0], [0], [1], [0, 0, 1, 1], [], []>} : vector<2x2xf32>, vector<2x32xf32>, vector<2x32xf32> -> vector<2x32xf32>
    %8 = arith.negf %7 : vector<2x32xf32>
    %9 = math.exp %8 : vector<2x32xf32>
    %cst_9 = arith.constant 1.000000e+00 : f32
    %10 = vector.broadcast %cst_9 : f32 to vector<2x32xf32>
    %11 = arith.addf %10, %9 : vector<2x32xf32>
    %12 = arith.divf %10, %11 : vector<2x32xf32>
    %cst_10 = arith.constant dense<0.000000e+00> : vector<2x512xf32>
    %13 = tpu.matmul %12, %3, %cst_10 {dimension_numbers = #tpu.dot_dimension_numbers<[1], [0], [0], [1], [0, 0, 1, 1], [], []>} : vector<2x32xf32>, vector<32x512xf32>, vector<2x512xf32> -> vector<2x512xf32>
    %14 = arith.mulf %0, %13 : vector<2x512xf32>
    %c0_11 = arith.constant 0 : index
    %c0_12 = arith.constant 0 : index
    %15 = vector.load %arg5[%c0_11, %c0_12] : memref<2x512xf32, #tpu.memory_space<vmem>>, vector<2x512xf32>
    tpu.vector_store %arg5[%c0_11, %c0_12], %14 {strides = array<i32>} : memref<2x512xf32, #tpu.memory_space<vmem>>, vector<2x512xf32>,
    return
  }
  func.func @transform_0(%arg0: i32) -> (i32, i32) {
    %c0_i32 = arith.constant 0 : i32
    %c0_i32_0 = arith.constant 0 : i32
    return %arg0, %c0_i32 : i32, i32
  }
  func.func @transform_1(%arg0: i32) -> (i32, i32) {
    %c0_i32 = arith.constant 0 : i32
    %c0_i32_0 = arith.constant 0 : i32
    %c0_i32_1 = arith.constant 0 : i32
    return %c0_i32, %c0_i32_0 : i32, i32
  }
  func.func @transform_2(%arg0: i32) -> (i32, i32) {
    %c0_i32 = arith.constant 0 : i32
    %c0_i32_0 = arith.constant 0 : i32
    %c0_i32_1 = arith.constant 0 : i32
    return %c0_i32, %c0_i32_0 : i32, i32
  }
  func.func @transform_3(%arg0: i32) -> (i32, i32) {
    %c0_i32 = arith.constant 0 : i32
    %c0_i32_0 = arith.constant 0 : i32
    %c0_i32_1 = arith.constant 0 : i32
    return %c0_i32, %c0_i32_0 : i32, i32
  }
  func.func @transform_4(%arg0: i32) -> (i32, i32) {
    %c0_i32 = arith.constant 0 : i32
    %c0_i32_0 = arith.constant 0 : i32
    return %arg0, %c0_i32 : i32, i32
  }
}

module attributes {stable_mosaic.version = 11 : i64} {
  func.func @_se_kernel(%arg0: i32, %arg1: memref<2x512xf32, #tpu.memory_space<vmem>>, %arg2: memref<512x2xf32, #tpu.memory_space<vmem>>, %arg3: memref<2x32xf32, #tpu.memory_space<vmem>>, %arg4: memref<32x512xf32, #tpu.memory_space<vmem>>, %arg5: memref<2x512xf32, #tpu.memory_space<vmem>>) attributes {dimension_semantics = [#tpu.dimension_semantics<parallel>], iteration_bounds = array<i64: 1>, scalar_prefetch = 0 : i64, scratch_operands = 0 : i64, tpu.core_type = #tpu.core_type<tc>, window_params = [{transform_indices = @transform_0, window_bounds = array<i64: 2, 512>}, {pipeline_mode = #tpu.pipeline_mode<synchronous>, transform_indices = @transform_1, window_bounds = array<i64: 512, 2>}, {pipeline_mode = #tpu.pipeline_mode<synchronous>, transform_indices = @transform_2, window_bounds = array<i64: 2, 32>}, {pipeline_mode = #tpu.pipeline_mode<synchronous>, transform_indices = @transform_3, window_bounds = array<i64: 32, 512>}, {transform_indices = @transform_4, window_bounds = array<i64: 2, 512>}]} {
    %c0 = arith.constant 0 : index
    %c0_0 = arith.constant 0 : index
    %0 = vector.load %arg1[%c0, %c0_0] : memref<2x512xf32, #tpu.memory_space<vmem>>, vector<2x512xf32>
    %c0_1 = arith.constant 0 : index
    %c0_2 = arith.constant 0 : index
    %1 = vector.load %arg2[%c0_1, %c0_2] : memref<512x2xf32, #tpu.memory_space<vmem>>, vector<512x2xf32>
    %c0_3 = arith.constant 0 : index
    %c0_4 = arith.constant 0 : index
    %2 = vector.load %arg3[%c0_3, %c0_4] : memref<2x32xf32, #tpu.memory_space<vmem>>, vector<2x32xf32>
    %c0_5 = arith.constant 0 : index
    %c0_6 = arith.constant 0 : index
    %3 = vector.load %arg4[%c0_5, %c0_6] : memref<32x512xf32, #tpu.memory_space<vmem>>, vector<32x512xf32>
    %cst = arith.constant dense<0.000000e+00> : vector<2x2xf32>
    %4 = tpu.matmul %0, %1, %cst {dimension_numbers = #tpu.dot_dimension_numbers<[1], [0], [0], [1], [0, 0, 1, 1], [], []>} : vector<2x512xf32>, vector<512x2xf32>, vector<2x2xf32> -> vector<2x2xf32>
    %cst_7 = arith.constant 0.000000e+00 : f32
    %5 = vector.broadcast %cst_7 : f32 to vector<2x2xf32>
    %6 = arith.maximumf %4, %5 : vector<2x2xf32>
    %cst_8 = arith.constant dense<0.000000e+00> : vector<2x32xf32>
    %7 = tpu.matmul %6, %2, %cst_8 {dimension_numbers = #tpu.dot_dimension_numbers<[1], [0], [0], [1], [0, 0, 1, 1], [], []>} : vector<2x2xf32>, vector<2x32xf32>, vector<2x32xf32> -> vector<2x32xf32>
    %8 = arith.negf %7 : vector<2x32xf32>
    %9 = math.exp %8 : vector<2x32xf32>
    %cst_9 = arith.constant 1.000000e+00 : f32
    %10 = vector.broadcast %cst_9 : f32 to vector<2x32xf32>
    %11 = arith.addf %10, %9 : vector<2x32xf32>
    %12 = arith.divf %10, %11 : vector<2x32xf32>
    %cst_10 = arith.constant dense<0.000000e+00> : vector<2x512xf32>
    %13 = tpu.matmul %12, %3, %cst_10 {dimension_numbers = #tpu.dot_dimension_numbers<[1], [0], [0], [1], [0, 0, 1, 1], [], []>} : vector<2x32xf32>, vector<32x512xf32>, vector<2x512xf32> -> vector<2x512xf32>
    %14 = arith.mulf %0, %13 : vector<2x512xf32>
    %c0_11 = arith.constant 0 : index
    %c0_12 = arith.constant 0 : index
    %15 = vector.load %arg5[%c0_11, %c0_12] : memref<2x512xf32, #tpu.memory_space<vmem>>, vector<2x512xf32>
    tpu.vector_store %arg5[%c0_11, %c0_12], %14 {strides = array<i32>} : memref<2x512xf32, #tpu.memory_space<vmem>>, vector<2x512xf32>,
    return
  }
  func.func @transform_0(%arg0: i32) -> (i32, i32) {
    %c0_i32 = arith.constant 0 : i32
    %c0_i32_0 = arith.constant 0 : i32
    return %arg0, %c0_i32 : i32, i32
  }
  func.func @transform_1(%arg0: i32) -> (i32, i32) {
    %c0_i32 = arith.constant 0 : i32
    %c0_i32_0 = arith.constant 0 : i32
    %c0_i32_1 = arith.constant 0 : i32
    return %c0_i32, %c0_i32_0 : i32, i32
  }
  func.func @transform_2(%arg0: i32) -> (i32, i32) {
    %c0_i32 = arith.constant 0 : i32
    %c0_i32_0 = arith.constant 0 : i32
    %c0_i32_1 = arith.constant 0 : i32
    return %c0_i32, %c0_i32_0 : i32, i32
  }
  func.func @transform_3(%arg0: i32) -> (i32, i32) {
    %c0_i32 = arith.constant 0 : i32
    %c0_i32_0 = arith.constant 0 : i32
    %c0_i32_1 = arith.constant 0 : i32
    return %c0_i32, %c0_i32_0 : i32, i32
  }
  func.func @transform_4(%arg0: i32) -> (i32, i32) {
    %c0_i32 = arith.constant 0 : i32
    %c0_i32_0 = arith.constant 0 : i32
    return %arg0, %c0_i32 : i32, i32
  }
}

</mosaic_0001>

<llo_original>
// kernel: tpu_custom_call.1
$region0: #{tpu_custom_call.1}
  #allocation0 [shape = 'u32[]', space=smem, size = 0x4, offset = 0x4, fixed_abs, tag = 'smem constant byte address 0x4 - core index']
  #allocation1 [shape = 'u32[144,128]{1,0:T(1,128)}', space=vmem, size = 0x12000, scoped, tag = 'internal scratch']
  %s0 = inlined_call_operand.vmem [shape: f32[2,512], index: 0, kind: input, shape index: {}]
  %s1 = inlined_call_operand.vmem [shape: f32[512,2], index: 1, kind: input, shape index: {}]
  %s2 = inlined_call_operand.vmem [shape: f32[2,32], index: 2, kind: input, shape index: {}]
  %s3 = inlined_call_operand.vmem [shape: f32[32,512], index: 3, kind: input, shape index: {}]
  %s4 = inlined_call_operand.hbm [shape: f32[2,512], index: 4, kind: output, shape index: {}]
  %s5 = sld [smem:[#allocation0]]
  $region26: #{tpu_custom_call.1} parent=0
    _
  %s7 = ssub.s32 1, %s5
  %s8 = scalar_select 0, %s7, %s5
  $region1: #{tpu_custom_call.1} parent=0
    #allocation2 [shape = 'u8[4096]{0}', space=vmem, size = 0x1000, scoped, tag = 'output window, operand 0, single buffered']
    #allocation3 [shape = 's32[1]{0}', space=sflag, size = 0x4, scoped, tag = 'scoped memory for tpu_custom_call.1']
    %9 = vsyncpa [#allocation3], 0
    // Predicated region
    $region2: #{tpu_custom_call.1} parent=1 // pred_check
      _
    $region3: #{tpu_custom_call.1} parent=1 // pred_check_branch
      %11 = sbr.rel (0) target = $region5
    $region4: #{tpu_custom_call.1} parent=1 // pred_region
      _
    $region5: #{tpu_custom_call.1} parent=1 // pred_fallthru
      _
    // Predicated region
    $region6: #{tpu_custom_call.1} parent=1 // pred_check
      _
    $region7: #{tpu_custom_call.1} parent=1 // pred_check_branch
      %13 = sbr.rel (0) target = $region9
    $region8: #{tpu_custom_call.1} parent=1 // pred_region
      _
    $region9: #{tpu_custom_call.1} parent=1 // pred_fallthru
      _
    // Predicated region
    $region10: #{tpu_custom_call.1} parent=1 // pred_check
      _
    $region11: #{tpu_custom_call.1} parent=1 // pred_check_branch
      %15 = sbr.rel (0) target = $region13
    $region12: #{tpu_custom_call.1} parent=1 // pred_region
      _
    $region13: #{tpu_custom_call.1} parent=1 // pred_fallthru
      _
    // Predicated region
    $region14: #{tpu_custom_call.1} parent=1 // pred_check
      _
    $region15: #{tpu_custom_call.1} parent=1 // pred_check_branch
      %17 = sbr.rel (0) target = $region17
    $region16: #{tpu_custom_call.1} parent=1 // pred_region
      _
    $region17: #{tpu_custom_call.1} parent=1 // pred_fallthru
      _
    %v18 = vld [vmem:[%s0] sm:$0xff]
    %v19 = vld [vmem:[%s1] sm:$0xff]
    %v20 = vld [vmem:[%s1 + $0x8] sm:$0xff]
    %v21 = vld [vmem:[%s1 + $0x10] sm:$0xff]
    %v22 = vld [vmem:[%s1 + $0x18] sm:$0xff]
    %v23 = vld [vmem:[%s1 + $0x20] sm:$0xff]
    %v24 = vld [vmem:[%s1 + $0x28] sm:$0xff]
    %v25 = vld [vmem:[%s1 + $0x30] sm:$0xff]
    %v26 = vld [vmem:[%s1 + $0x38] sm:$0xff]
    %v27 = vld [vmem:[%s1 + $0x40] sm:$0xff]
    %v28 = vld [vmem:[%s1 + $0x48] sm:$0xff]
    %v29 = vld [vmem:[%s1 + $0x50] sm:$0xff]
    %v30 = vld [vmem:[%s1 + $0x58] sm:$0xff]
    %v31 = vld [vmem:[%s1 + $0x60] sm:$0xff]
    %v32 = vld [vmem:[%s1 + $0x68] sm:$0xff]
    %v33 = vld [vmem:[%s1 + $0x70] sm:$0xff]
    %v34 = vld [vmem:[%s1 + $0x78] sm:$0xff]
    %v35 = vld [vmem:[%s1 + $0x80] sm:$0xff]
    %v36 = vld [vmem:[%s1 + $0x88] sm:$0xff]
    %v37 = vld [vmem:[%s1 + $0x90] sm:$0xff]
    %v38 = vld [vmem:[%s1 + $0x98] sm:$0xff]
    %v39 = vld [vmem:[%s1 + $0xa0] sm:$0xff]
    %v40 = vld [vmem:[%s1 + $0xa8] sm:$0xff]
    %v41 = vld [vmem:[%s1 + $0xb0] sm:$0xff]
    %v42 = vld [vmem:[%s1 + $0xb8] sm:$0xff]
    %v43 = vld [vmem:[%s1 + $0xc0] sm:$0xff]
    %v44 = vld [vmem:[%s1 + $0xc8] sm:$0xff]
    %v45 = vld [vmem:[%s1 + $0xd0] sm:$0xff]
    %v46 = vld [vmem:[%s1 + $0xd8] sm:$0xff]
    %v47 = vld [vmem:[%s1 + $0xe0] sm:$0xff]
    %v48 = vld [vmem:[%s1 + $0xe8] sm:$0xff]
    %v49 = vld [vmem:[%s1 + $0xf0] sm:$0xff]
    %v50 = vld [vmem:[%s1 + $0xf8] sm:$0xff]
    %v51 = vld [vmem:[%s1 + $0x100] sm:$0xff]
    %v52 = vld [vmem:[%s1 + $0x108] sm:$0xff]
    %v53 = vld [vmem:[%s1 + $0x110] sm:$0xff]
    %v54 = vld [vmem:[%s1 + $0x118] sm:$0xff]
    %v55 = vld [vmem:[%s1 + $0x120] sm:$0xff]
    %v56 = vld [vmem:[%s1 + $0x128] sm:$0xff]
    %v57 = vld [vmem:[%s1 + $0x130] sm:$0xff]
    %v58 = vld [vmem:[%s1 + $0x138] sm:$0xff]
    %v59 = vld [vmem:[%s1 + $0x140] sm:$0xff]
    %v60 = vld [vmem:[%s1 + $0x148] sm:$0xff]
    %v61 = vld [vmem:[%s1 + $0x150] sm:$0xff]
    %v62 = vld [vmem:[%s1 + $0x158] sm:$0xff]
    %v63 = vld [vmem:[%s1 + $0x160] sm:$0xff]
    %v64 = vld [vmem:[%s1 + $0x168] sm:$0xff]
    %v65 = vld [vmem:[%s1 + $0x170] sm:$0xff]
    %v66 = vld [vmem:[%s1 + $0x178] sm:$0xff]
    %v67 = vld [vmem:[%s1 + $0x180] sm:$0xff]
    %v68 = vld [vmem:[%s1 + $0x188] sm:$0xff]
    %v69 = vld [vmem:[%s1 + $0x190] sm:$0xff]
    %v70 = vld [vmem:[%s1 + $0x198] sm:$0xff]
    %v71 = vld [vmem:[%s1 + $0x1a0] sm:$0xff]
    %v72 = vld [vmem:[%s1 + $0x1a8] sm:$0xff]
    %v73 = vld [vmem:[%s1 + $0x1b0] sm:$0xff]
    %v74 = vld [vmem:[%s1 + $0x1b8] sm:$0xff]
    %v75 = vld [vmem:[%s1 + $0x1c0] sm:$0xff]
    %v76 = vld [vmem:[%s1 + $0x1c8] sm:$0xff]
    %v77 = vld [vmem:[%s1 + $0x1d0] sm:$0xff]
    %v78 = vld [vmem:[%s1 + $0x1d8] sm:$0xff]
    %v79 = vld [vmem:[%s1 + $0x1e0] sm:$0xff]
    %v80 = vld [vmem:[%s1 + $0x1e8] sm:$0xff]
    %v81 = vld [vmem:[%s1 + $0x1f0] sm:$0xff]
    %v82 = vld [vmem:[%s1 + $0x1f8] sm:$0xff]
    %v83 = vld [vmem:[%s2] sm:$0x3]
    %v84 = vld [vmem:[%s3] sm:$0xff]
    %v85 = vld [vmem:[%s3 + $0x8] sm:$0xff]
    %v86 = vld [vmem:[%s3 + $0x10] sm:$0xff]
    %v87 = vld [vmem:[%s3 + $0x18] sm:$0xff]
    %v88 = vld [vmem:[%s3 + $0x20] sm:$0xff]
    %v89 = vld [vmem:[%s3 + $0x28] sm:$0xff]
    %v90 = vld [vmem:[%s3 + $0x30] sm:$0xff]
    %v91 = vld [vmem:[%s3 + $0x38] sm:$0xff]
    %v92 = vld [vmem:[%s3 + $0x40] sm:$0xff]
    %v93 = vld [vmem:[%s3 + $0x48] sm:$0xff]
    %v94 = vld [vmem:[%s3 + $0x50] sm:$0xff]
    %v95 = vld [vmem:[%s3 + $0x58] sm:$0xff]
    %v96 = vld [vmem:[%s3 + $0x60] sm:$0xff]
    %v97 = vld [vmem:[%s3 + $0x68] sm:$0xff]
    %v98 = vld [vmem:[%s3 + $0x70] sm:$0xff]
    %v99 = vld [vmem:[%s3 + $0x78] sm:$0xff]
    %v101 = vcombine.high %v18, %v18
    %v103 = vunpack.c.l.s4 1983009808
    %v104 = vunpack.c.0.s8 %v103
    %v105 = vlaneseq
    %v106 = vshrl.u32 %v105, 7
    %v107 = vsub.s32 %v104, %v106
    %v108 = vrot.slane %v18, %v107
    %v110 = vunpack.c.l.s4 1983009808
    %v111 = vunpack.c.0.s8 %v110
    %v112 = vlaneseq
    %v113 = vshrl.u32 %v112, 7
    %v114 = vsub.s32 %v111, %v113
    %v115 = vrot.slane %v101, %v114
    %v116 = vcombine.high %v108, %v108
    %v117 = vcombine.high %v115, %v115
    %122 = vmatprep.subr.mxu0 0.0
    %123 = vmatpush1.msra.mxu0 %v19
    %124 = vmatprep.subr.mxu0 0.0
    %125 = vmatpush1.msra.mxu0 %v20
    %126 = vmatprep.subr.mxu0 0.0
    %127 = vmatpush1.msra.mxu0 %v21
    %128 = vmatprep.subr.mxu0 0.0
    %129 = vmatpush1.msra.mxu0 %v22
    %130 = vmatprep.subr.mxu0 0.0
    %131 = vmatpush1.msra.mxu0 %v23
    %132 = vmatprep.subr.mxu0 0.0
    %133 = vmatpush1.msra.mxu0 %v24
    %134 = vmatprep.subr.mxu0 0.0
    %135 = vmatpush1.msra.mxu0 %v25
    %136 = vmatprep.subr.mxu0 0.0
    %137 = vmatpush1.msra.mxu0 %v26
    %138 = vmatprep.subr.mxu0 0.0
    %139 = vmatpush1.msra.mxu0 %v27
    %140 = vmatprep.subr.mxu0 0.0
    %141 = vmatpush1.msra.mxu0 %v28
    %142 = vmatprep.subr.mxu0 0.0
    %143 = vmatpush1.msra.mxu0 %v29
    %144 = vmatprep.subr.mxu0 0.0
    %145 = vmatpush1.msra.mxu0 %v30
    %146 = vmatprep.subr.mxu0 0.0
    %147 = vmatpush1.msra.mxu0 %v31
    %148 = vmatprep.subr.mxu0 0.0
    %149 = vmatpush1.msra.mxu0 %v32
    %150 = vmatprep.subr.mxu0 0.0
    %151 = vmatpush1.msra.mxu0 %v33
    %152 = vmatprep.subr.mxu0 0.0
    %153 = vmatpush1.msra.mxu0 %v34
    %154 = vmatprep.subr.mxu0 0.0
    %155 = vmatpush1.msra.mxu0 %v35
    %156 = vmatprep.subr.mxu0 0.0
    %157 = vmatpush1.msra.mxu0 %v36
    %158 = vmatprep.subr.mxu0 0.0
    %159 = vmatpush1.msra.mxu0 %v37
    %160 = vmatprep.subr.mxu0 0.0
    %161 = vmatpush1.msra.mxu0 %v38
    %162 = vmatprep.subr.mxu0 0.0
    %163 = vmatpush1.msra.mxu0 %v39
    %164 = vmatprep.subr.mxu0 0.0
    %165 = vmatpush1.msra.mxu0 %v40
    %166 = vmatprep.subr.mxu0 0.0
    %167 = vmatpush1.msra.mxu0 %v41
    %168 = vmatprep.subr.mxu0 0.0
    %169 = vmatpush1.msra.mxu0 %v42
    %170 = vmatprep.subr.mxu0 0.0
    %171 = vmatpush1.msra.mxu0 %v43
    %172 = vmatprep.subr.mxu0 0.0
    %173 = vmatpush1.msra.mxu0 %v44
    %174 = vmatprep.subr.mxu0 0.0
    %175 = vmatpush1.msra.mxu0 %v45
    %176 = vmatprep.subr.mxu0 0.0
    %177 = vmatpush1.msra.mxu0 %v46
    %178 = vmatprep.subr.mxu0 0.0
    %179 = vmatpush1.msra.mxu0 %v47
    %180 = vmatprep.subr.mxu0 0.0
    %181 = vmatpush1.msra.mxu0 %v48
    %182 = vmatprep.subr.mxu0 0.0
    %183 = vmatpush1.msra.mxu0 %v49
    %184 = vmatprep.subr.mxu0 0.0
    %185 = vmatpush1.msra.mxu0 %v50
    %186 = vmatprep.mubr.f32.mxu0 %v116
    %187 = vmatmul.mubr.f32.gmra.mrb[0].mxu0 %v108
    %v188 = vpop.f32.mrb[0].mxu0
    %v189 = vadd.f32 0.0, %v188
    %v190 = vpop.f32.mrb[0].mxu0
    %191 = vdwg.mxu0
    %192 = vmatprep.subr.mxu0 0.0
    %193 = vmatpush1.msra.mxu0 %v51
    %194 = vmatprep.subr.mxu0 0.0
    %195 = vmatpush1.msra.mxu0 %v52
    %196 = vmatprep.subr.mxu0 0.0
    %197 = vmatpush1.msra.mxu0 %v53
    %198 = vmatprep.subr.mxu0 0.0
    %199 = vmatpush1.msra.mxu0 %v54
    %200 = vmatprep.subr.mxu0 0.0
    %201 = vmatpush1.msra.mxu0 %v55
    %202 = vmatprep.subr.mxu0 0.0
    %203 = vmatpush1.msra.mxu0 %v56
    %204 = vmatprep.subr.mxu0 0.0
    %205 = vmatpush1.msra.mxu0 %v57
    %206 = vmatprep.subr.mxu0 0.0
    %207 = vmatpush1.msra.mxu0 %v58
    %208 = vmatprep.subr.mxu0 0.0
    %209 = vmatpush1.msra.mxu0 %v59
    %210 = vmatprep.subr.mxu0 0.0
    %211 = vmatpush1.msra.mxu0 %v60
    %212 = vmatprep.subr.mxu0 0.0
    %213 = vmatpush1.msra.mxu0 %v61
    %214 = vmatprep.subr.mxu0 0.0
    %215 = vmatpush1.msra.mxu0 %v62
    %216 = vmatprep.subr.mxu0 0.0
    %217 = vmatpush1.msra.mxu0 %v63
    %218 = vmatprep.subr.mxu0 0.0
    %219 = vmatpush1.msra.mxu0 %v64
    %220 = vmatprep.subr.mxu0 0.0
    %221 = vmatpush1.msra.mxu0 %v65
    %222 = vmatprep.subr.mxu0 0.0
    %223 = vmatpush1.msra.mxu0 %v66
    %224 = vmatprep.subr.mxu0 0.0
    %225 = vmatpush1.msra.mxu0 %v67
    %226 = vmatprep.subr.mxu0 0.0
    %227 = vmatpush1.msra.mxu0 %v68
    %228 = vmatprep.subr.mxu0 0.0
    %229 = vmatpush1.msra.mxu0 %v69
    %230 = vmatprep.subr.mxu0 0.0
    %231 = vmatpush1.msra.mxu0 %v70
    %232 = vmatprep.subr.mxu0 0.0
    %233 = vmatpush1.msra.mxu0 %v71
    %234 = vmatprep.subr.mxu0 0.0
    %235 = vmatpush1.msra.mxu0 %v72
    %236 = vmatprep.subr.mxu0 0.0
    %237 = vmatpush1.msra.mxu0 %v73
    %238 = vmatprep.subr.mxu0 0.0
    %239 = vmatpush1.msra.mxu0 %v74
    %240 = vmatprep.subr.mxu0 0.0
    %241 = vmatpush1.msra.mxu0 %v75
    %242 = vmatprep.subr.mxu0 0.0
    %243 = vmatpush1.msra.mxu0 %v76
    %244 = vmatprep.subr.mxu0 0.0
    %245 = vmatpush1.msra.mxu0 %v77
    %246 = vmatprep.subr.mxu0 0.0
    %247 = vmatpush1.msra.mxu0 %v78
    %248 = vmatprep.subr.mxu0 0.0
    %249 = vmatpush1.msra.mxu0 %v79
    %250 = vmatprep.subr.mxu0 0.0
    %251 = vmatpush1.msra.mxu0 %v80
    %252 = vmatprep.subr.mxu0 0.0
    %253 = vmatpush1.msra.mxu0 %v81
    %254 = vmatprep.subr.mxu0 0.0
    %255 = vmatpush1.msra.mxu0 %v82
    %256 = vmatprep.mubr.f32.mxu0 %v117
    %257 = vmatmul.mubr.f32.gmra.mrb[0].mxu0 %v115
    %v258 = vpop.f32.mrb[0].mxu0
    %v259 = vadd.f32 %v189, %v258
    %v260 = vpop.f32.mrb[0].mxu0
    %261 = vdwg.mxu0
    %v262 = vmax.f32 %v259, 0.0
    %vm263 = vcmask 15360
    %v265 = vsel %vm263, %v262, 0
    %vm267 = vcmask 1041408
    %v269 = vsel %vm267, %v83, 0
    %271 = vmatprep.subr.mxu0 0.0
    %272 = vmatpush1.msra.mxu0 %v269
    %273 = vmatprep.subr.mxu0 0.0
    %274 = vmatpush1.msra.mxu0 0.0
    %275 = vmatprep.subr.mxu0 0.0
    %276 = vmatpush1.msra.mxu0 0.0
    %277 = vmatprep.subr.mxu0 0.0
    %278 = vmatpush1.msra.mxu0 0.0
    %279 = vmatprep.subr.mxu0 0.0
    %280 = vmatpush1.msra.mxu0 0.0
    %281 = vmatprep.subr.mxu0 0.0
    %282 = vmatpush1.msra.mxu0 0.0
    %283 = vmatprep.subr.mxu0 0.0
    %284 = vmatpush1.msra.mxu0 0.0
    %285 = vmatprep.subr.mxu0 0.0
    %286 = vmatpush1.msra.mxu0 0.0
    %287 = vmatprep.subr.mxu0 0.0
    %288 = vmatpush1.msra.mxu0 0.0
    %289 = vmatprep.subr.mxu0 0.0
    %290 = vmatpush1.msra.mxu0 0.0
    %291 = vmatprep.subr.mxu0 0.0
    %292 = vmatpush1.msra.mxu0 0.0
    %293 = vmatprep.subr.mxu0 0.0
    %294 = vmatpush1.msra.mxu0 0.0
    %295 = vmatprep.subr.mxu0 0.0
    %296 = vmatpush1.msra.mxu0 0.0
    %297 = vmatprep.subr.mxu0 0.0
    %298 = vmatpush1.msra.mxu0 0.0
    %299 = vmatprep.subr.mxu0 0.0
    %300 = vmatpush1.msra.mxu0 0.0
    %301 = vmatprep.subr.mxu0 0.0
    %302 = vmatpush1.msra.mxu0 0.0
    %303 = vmatprep.subr.mxu0 0.0
    %304 = vmatpush1.msra.mxu0 0.0
    %305 = vmatprep.subr.mxu0 0.0
    %306 = vmatpush1.msra.mxu0 0.0
    %307 = vmatprep.subr.mxu0 0.0
    %308 = vmatpush1.msra.mxu0 0.0
    %309 = vmatprep.subr.mxu0 0.0
    %310 = vmatpush1.msra.mxu0 0.0
    %311 = vmatprep.subr.mxu0 0.0
    %312 = vmatpush1.msra.mxu0 0.0
    %313 = vmatprep.subr.mxu0 0.0
    %314 = vmatpush1.msra.mxu0 0.0
    %315 = vmatprep.subr.mxu0 0.0
    %316 = vmatpush1.msra.mxu0 0.0
    %317 = vmatprep.subr.mxu0 0.0
    %318 = vmatpush1.msra.mxu0 0.0
    %319 = vmatprep.subr.mxu0 0.0
    %320 = vmatpush1.msra.mxu0 0.0
    %321 = vmatprep.subr.mxu0 0.0
    %322 = vmatpush1.msra.mxu0 0.0
    %323 = vmatprep.subr.mxu0 0.0
    %324 = vmatpush1.msra.mxu0 0.0
    %325 = vmatprep.subr.mxu0 0.0
    %326 = vmatpush1.msra.mxu0 0.0
    %327 = vmatprep.subr.mxu0 0.0
    %328 = vmatpush1.msra.mxu0 0.0
    %329 = vmatprep.subr.mxu0 0.0
    %330 = vmatpush1.msra.mxu0 0.0
    %331 = vmatprep.subr.mxu0 0.0
    %332 = vmatpush1.msra.mxu0 0.0
    %333 = vmatprep.subr.mxu0 0.0
    %334 = vmatpush1.msra.mxu0 0.0
    %335 = vmatprep.mubr.f32.mxu0 0.0
    %336 = vmatmul.mubr.f32.gmra.mrb[0].mxu0 %v265
    %v337 = vpop.f32.mrb[0].mxu0
    %v338 = vadd.f32 0.0, %v337
    %v339 = vpop.f32.mrb[0].mxu0
    %340 = vdwg.mxu0
    %v341 = vxor.u32 %v338, 2147483648
    %v342 = vmul.f32 %v341, 1.442695
    %v343 = vpow.pop %v342
    %v344 = vadd.f32 %v343, 1.0
    %v345 = vrcp.pop %v344
    %v346 = vmul.f32 1.0, %v345
    %vm347 = vcmask 261120
    %v349 = vsel %vm347, %v346, 0
    %351 = vmatprep.subr.mxu0 %v85
    %352 = vmatpush1.msra.mxu0 %v84
    %353 = vmatprep.subr.mxu0 %v89
    %354 = vmatpush1.msra.mxu0 %v88
    %355 = vmatprep.subr.mxu0 %v93
    %356 = vmatpush1.msra.mxu0 %v92
    %357 = vmatprep.subr.mxu0 %v97
    %358 = vmatpush1.msra.mxu0 %v96
    %359 = vmatprep.subr.mxu0 0.0
    %360 = vmatpush1.msra.mxu0 0.0
    %361 = vmatprep.subr.mxu0 0.0
    %362 = vmatpush1.msra.mxu0 0.0
    %363 = vmatprep.subr.mxu0 0.0
    %364 = vmatpush1.msra.mxu0 0.0
    %365 = vmatprep.subr.mxu0 0.0
    %366 = vmatpush1.msra.mxu0 0.0
    %367 = vmatprep.subr.mxu0 0.0
    %368 = vmatpush1.msra.mxu0 0.0
    %369 = vmatprep.subr.mxu0 0.0
    %370 = vmatpush1.msra.mxu0 0.0
    %371 = vmatprep.subr.mxu0 0.0
    %372 = vmatpush1.msra.mxu0 0.0
    %373 = vmatprep.subr.mxu0 0.0
    %374 = vmatpush1.msra.mxu0 0.0
    %375 = vmatprep.subr.mxu0 0.0
    %376 = vmatpush1.msra.mxu0 0.0
    %377 = vmatprep.subr.mxu0 0.0
    %378 = vmatpush1.msra.mxu0 0.0
    %379 = vmatprep.subr.mxu0 0.0
    %380 = vmatpush1.msra.mxu0 0.0
    %381 = vmatprep.subr.mxu0 0.0
    %382 = vmatpush1.msra.mxu0 0.0
    %383 = vmatprep.subr.mxu0 0.0
    %384 = vmatpush1.msra.mxu0 0.0
    %385 = vmatprep.subr.mxu0 0.0
    %386 = vmatpush1.msra.mxu0 0.0
    %387 = vmatprep.subr.mxu0 0.0
    %388 = vmatpush1.msra.mxu0 0.0
    %389 = vmatprep.subr.mxu0 0.0
    %390 = vmatpush1.msra.mxu0 0.0
    %391 = vmatprep.subr.mxu0 0.0
    %392 = vmatpush1.msra.mxu0 0.0
    %393 = vmatprep.subr.mxu0 0.0
    %394 = vmatpush1.msra.mxu0 0.0
    %395 = vmatprep.subr.mxu0 0.0
    %396 = vmatpush1.msra.mxu0 0.0
    %397 = vmatprep.subr.mxu0 0.0
    %398 = vmatpush1.msra.mxu0 0.0
    %399 = vmatprep.subr.mxu0 0.0
    %400 = vmatpush1.msra.mxu0 0.0
    %401 = vmatprep.subr.mxu0 0.0
    %402 = vmatpush1.msra.mxu0 0.0
    %403 = vmatprep.subr.mxu0 0.0
    %404 = vmatpush1.msra.mxu0 0.0
    %405 = vmatprep.subr.mxu0 0.0
    %406 = vmatpush1.msra.mxu0 0.0
    %407 = vmatprep.subr.mxu0 0.0
    %408 = vmatpush1.msra.mxu0 0.0
    %409 = vmatprep.subr.mxu0 0.0
    %410 = vmatpush1.msra.mxu0 0.0
    %411 = vmatprep.subr.mxu0 0.0
    %412 = vmatpush1.msra.mxu0 0.0
    %413 = vmatprep.subr.mxu0 0.0
    %414 = vmatpush1.msra.mxu0 0.0
    %415 = vmatprep.mubr.f32.mxu0 0.0
    %416 = vmatmul.mubr.f32.gmra.mrb[0].mxu0 %v349
    %v417 = vpop.f32.mrb[0].mxu0
    %v418 = vadd.f32 0.0, %v417
    %v419 = vpop.f32.mrb[0].mxu0
    %v420 = vadd.f32 0.0, %v419
    %421 = vdwg.mxu0
    %422 = vmatprep.subr.mxu0 %v87
    %423 = vmatpush1.msra.mxu0 %v86
    %424 = vmatprep.subr.mxu0 %v91
    %425 = vmatpush1.msra.mxu0 %v90
    %426 = vmatprep.subr.mxu0 %v95
    %427 = vmatpush1.msra.mxu0 %v94
    %428 = vmatprep.subr.mxu0 %v99
    %429 = vmatpush1.msra.mxu0 %v98
    %430 = vmatprep.subr.mxu0 0.0
    %431 = vmatpush1.msra.mxu0 0.0
    %432 = vmatprep.subr.mxu0 0.0
    %433 = vmatpush1.msra.mxu0 0.0
    %434 = vmatprep.subr.mxu0 0.0
    %435 = vmatpush1.msra.mxu0 0.0
    %436 = vmatprep.subr.mxu0 0.0
    %437 = vmatpush1.msra.mxu0 0.0
    %438 = vmatprep.subr.mxu0 0.0
    %439 = vmatpush1.msra.mxu0 0.0
    %440 = vmatprep.subr.mxu0 0.0
    %441 = vmatpush1.msra.mxu0 0.0
    %442 = vmatprep.subr.mxu0 0.0
    %443 = vmatpush1.msra.mxu0 0.0
    %444 = vmatprep.subr.mxu0 0.0
    %445 = vmatpush1.msra.mxu0 0.0
    %446 = vmatprep.subr.mxu0 0.0
    %447 = vmatpush1.msra.mxu0 0.0
    %448 = vmatprep.subr.mxu0 0.0
    %449 = vmatpush1.msra.mxu0 0.0
    %450 = vmatprep.subr.mxu0 0.0
    %451 = vmatpush1.msra.mxu0 0.0
    %452 = vmatprep.subr.mxu0 0.0
    %453 = vmatpush1.msra.mxu0 0.0
    %454 = vmatprep.subr.mxu0 0.0
    %455 = vmatpush1.msra.mxu0 0.0
    %456 = vmatprep.subr.mxu0 0.0
    %457 = vmatpush1.msra.mxu0 0.0
    %458 = vmatprep.subr.mxu0 0.0
    %459 = vmatpush1.msra.mxu0 0.0
    %460 = vmatprep.subr.mxu0 0.0
    %461 = vmatpush1.msra.mxu0 0.0
    %462 = vmatprep.subr.mxu0 0.0
    %463 = vmatpush1.msra.mxu0 0.0
    %464 = vmatprep.subr.mxu0 0.0
    %465 = vmatpush1.msra.mxu0 0.0
    %466 = vmatprep.subr.mxu0 0.0
    %467 = vmatpush1.msra.mxu0 0.0
    %468 = vmatprep.subr.mxu0 0.0
    %469 = vmatpush1.msra.mxu0 0.0
    %470 = vmatprep.subr.mxu0 0.0
    %471 = vmatpush1.msra.mxu0 0.0
    %472 = vmatprep.subr.mxu0 0.0
    %473 = vmatpush1.msra.mxu0 0.0
    %474 = vmatprep.subr.mxu0 0.0
    %475 = vmatpush1.msra.mxu0 0.0
    %476 = vmatprep.subr.mxu0 0.0
    %477 = vmatpush1.msra.mxu0 0.0
    %478 = vmatprep.subr.mxu0 0.0
    %479 = vmatpush1.msra.mxu0 0.0
    %480 = vmatprep.subr.mxu0 0.0
    %481 = vmatpush1.msra.mxu0 0.0
    %482 = vmatprep.subr.mxu0 0.0
    %483 = vmatpush1.msra.mxu0 0.0
    %484 = vmatprep.subr.mxu0 0.0
    %485 = vmatpush1.msra.mxu0 0.0
    %486 = vmatprep.mubr.f32.mxu0 0.0
    %487 = vmatmul.mubr.f32.gmra.mrb[0].mxu0 %v349
    %v488 = vpop.f32.mrb[0].mxu0
    %v489 = vadd.f32 0.0, %v488
    %v490 = vpop.f32.mrb[0].mxu0
    %v491 = vadd.f32 0.0, %v490
    %492 = vdwg.mxu0
    %v497 = vcombine.low %v418, %v420
    %v498 = vcombine.low %v489, %v491
    %v500 = vunpack.c.l.s4 1983009808
    %v501 = vunpack.c.0.s8 %v500
    %v502 = vlaneseq
    %v503 = vshrl.u32 %v502, 7
    %v504 = vsub.s32 %v501, %v503
    %v505 = vrot.slane %v497, %v504
    %v507 = vunpack.c.l.s4 1983009808
    %v508 = vunpack.c.0.s8 %v507
    %v509 = vlaneseq
    %v510 = vshrl.u32 %v509, 7
    %v511 = vsub.s32 %v508, %v510
    %v512 = vrot.slane %v498, %v511
    %v513 = vcombine.low %v505, %v512
    %v515 = vmul.f32 %v18, %v513
    %516 = vst [vmem:[#allocation2] sm:$0xff] %v515
    // Predicated region
    $region18: #{tpu_custom_call.1} parent=1 // pred_check
      _
    $region19: #{tpu_custom_call.1} parent=1 // pred_check_branch
      %518 = sbr.rel (0) target = $region21
    $region20: #{tpu_custom_call.1} parent=1 // pred_region
      %s520 = ssub.s32 128, 128
      %521 = vsyncadd [#allocation3], %s520
      %s523 = sshll.u32 [#allocation2], 4
      %s524 = int_to_ptr.vmem [resolvable:$true] %s523
      %526 = dma.vmem_to_hbm [thread:$0]  %s524, 128, %s4, [#allocation3]
    $region21: #{tpu_custom_call.1} parent=1 // pred_fallthru
      _
    // Predicated region
    $region22: #{tpu_custom_call.1} parent=1 // pred_check
      _
    $region23: #{tpu_custom_call.1} parent=1 // pred_check_branch
      %528 = sbr.rel (0) target = $region25
    $region24: #{tpu_custom_call.1} parent=1 // pred_region
      %529 = dma.done [#allocation3], 128
    $region25: #{tpu_custom_call.1} parent=1 // pred_fallthru
      _
    %530 = vsyncpa [#allocation3], 1

// kernel: tpu_custom_call.1
$region0: #{tpu_custom_call.1}
  #allocation0 [shape = 'u32[]', space=smem, size = 0x4, offset = 0x4, fixed_abs, tag = 'smem constant byte address 0x4 - core index']
  #allocation1 [shape = 'u32[144,128]{1,0:T(1,128)}', space=vmem, size = 0x12000, scoped, tag = 'internal scratch']
  %s0 = inlined_call_operand.vmem [shape: f32[2,512], index: 0, kind: input, shape index: {}]
  %s1 = inlined_call_operand.vmem [shape: f32[512,2], index: 1, kind: input, shape index: {}]
  %s2 = inlined_call_operand.vmem [shape: f32[2,32], index: 2, kind: input, shape index: {}]
  %s3 = inlined_call_operand.vmem [shape: f32[32,512], index: 3, kind: input, shape index: {}]
  %s4 = inlined_call_operand.hbm [shape: f32[2,512], index: 4, kind: output, shape index: {}]
  %s5 = sld [smem:[#allocation0]]
  $region26: #{tpu_custom_call.1} parent=0
    _
  %s7 = ssub.s32 1, %s5
  %s8 = scalar_select 0, %s7, %s5
  $region1: #{tpu_custom_call.1} parent=0
    #allocation2 [shape = 'u8[4096]{0}', space=vmem, size = 0x1000, scoped, tag = 'output window, operand 0, single buffered']
    #allocation3 [shape = 's32[1]{0}', space=sflag, size = 0x4, scoped, tag = 'scoped memory for tpu_custom_call.1']
    %9 = vsyncpa [#allocation3], 0
    // Predicated region
    $region2: #{tpu_custom_call.1} parent=1 // pred_check
      _
    $region3: #{tpu_custom_call.1} parent=1 // pred_check_branch
      %11 = sbr.rel (0) target = $region5
    $region4: #{tpu_custom_call.1} parent=1 // pred_region
      _
    $region5: #{tpu_custom_call.1} parent=1 // pred_fallthru
      _
    // Predicated region
    $region6: #{tpu_custom_call.1} parent=1 // pred_check
      _
    $region7: #{tpu_custom_call.1} parent=1 // pred_check_branch
      %13 = sbr.rel (0) target = $region9
    $region8: #{tpu_custom_call.1} parent=1 // pred_region
      _
    $region9: #{tpu_custom_call.1} parent=1 // pred_fallthru
      _
    // Predicated region
    $region10: #{tpu_custom_call.1} parent=1 // pred_check
      _
    $region11: #{tpu_custom_call.1} parent=1 // pred_check_branch
      %15 = sbr.rel (0) target = $region13
    $region12: #{tpu_custom_call.1} parent=1 // pred_region
      _
    $region13: #{tpu_custom_call.1} parent=1 // pred_fallthru
      _
    // Predicated region
    $region14: #{tpu_custom_call.1} parent=1 // pred_check
      _
    $region15: #{tpu_custom_call.1} parent=1 // pred_check_branch
      %17 = sbr.rel (0) target = $region17
    $region16: #{tpu_custom_call.1} parent=1 // pred_region
      _
    $region17: #{tpu_custom_call.1} parent=1 // pred_fallthru
      _
    %v18 = vld [vmem:[%s0] sm:$0xff]
    %v19 = vld [vmem:[%s1] sm:$0xff]
    %v20 = vld [vmem:[%s1 + $0x8] sm:$0xff]
    %v21 = vld [vmem:[%s1 + $0x10] sm:$0xff]
    %v22 = vld [vmem:[%s1 + $0x18] sm:$0xff]
    %v23 = vld [vmem:[%s1 + $0x20] sm:$0xff]
    %v24 = vld [vmem:[%s1 + $0x28] sm:$0xff]
    %v25 = vld [vmem:[%s1 + $0x30] sm:$0xff]
    %v26 = vld [vmem:[%s1 + $0x38] sm:$0xff]
    %v27 = vld [vmem:[%s1 + $0x40] sm:$0xff]
    %v28 = vld [vmem:[%s1 + $0x48] sm:$0xff]
    %v29 = vld [vmem:[%s1 + $0x50] sm:$0xff]
    %v30 = vld [vmem:[%s1 + $0x58] sm:$0xff]
    %v31 = vld [vmem:[%s1 + $0x60] sm:$0xff]
    %v32 = vld [vmem:[%s1 + $0x68] sm:$0xff]
    %v33 = vld [vmem:[%s1 + $0x70] sm:$0xff]
    %v34 = vld [vmem:[%s1 + $0x78] sm:$0xff]
    %v35 = vld [vmem:[%s1 + $0x80] sm:$0xff]
    %v36 = vld [vmem:[%s1 + $0x88] sm:$0xff]
    %v37 = vld [vmem:[%s1 + $0x90] sm:$0xff]
    %v38 = vld [vmem:[%s1 + $0x98] sm:$0xff]
    %v39 = vld [vmem:[%s1 + $0xa0] sm:$0xff]
    %v40 = vld [vmem:[%s1 + $0xa8] sm:$0xff]
    %v41 = vld [vmem:[%s1 + $0xb0] sm:$0xff]
    %v42 = vld [vmem:[%s1 + $0xb8] sm:$0xff]
    %v43 = vld [vmem:[%s1 + $0xc0] sm:$0xff]
    %v44 = vld [vmem:[%s1 + $0xc8] sm:$0xff]
    %v45 = vld [vmem:[%s1 + $0xd0] sm:$0xff]
    %v46 = vld [vmem:[%s1 + $0xd8] sm:$0xff]
    %v47 = vld [vmem:[%s1 + $0xe0] sm:$0xff]
    %v48 = vld [vmem:[%s1 + $0xe8] sm:$0xff]
    %v49 = vld [vmem:[%s1 + $0xf0] sm:$0xff]
    %v50 = vld [vmem:[%s1 + $0xf8] sm:$0xff]
    %v51 = vld [vmem:[%s1 + $0x100] sm:$0xff]
    %v52 = vld [vmem:[%s1 + $0x108] sm:$0xff]
    %v53 = vld [vmem:[%s1 + $0x110] sm:$0xff]
    %v54 = vld [vmem:[%s1 + $0x118] sm:$0xff]
    %v55 = vld [vmem:[%s1 + $0x120] sm:$0xff]
    %v56 = vld [vmem:[%s1 + $0x128] sm:$0xff]
    %v57 = vld [vmem:[%s1 + $0x130] sm:$0xff]
    %v58 = vld [vmem:[%s1 + $0x138] sm:$0xff]
    %v59 = vld [vmem:[%s1 + $0x140] sm:$0xff]
    %v60 = vld [vmem:[%s1 + $0x148] sm:$0xff]
    %v61 = vld [vmem:[%s1 + $0x150] sm:$0xff]
    %v62 = vld [vmem:[%s1 + $0x158] sm:$0xff]
    %v63 = vld [vmem:[%s1 + $0x160] sm:$0xff]
    %v64 = vld [vmem:[%s1 + $0x168] sm:$0xff]
    %v65 = vld [vmem:[%s1 + $0x170] sm:$0xff]
    %v66 = vld [vmem:[%s1 + $0x178] sm:$0xff]
    %v67 = vld [vmem:[%s1 + $0x180] sm:$0xff]
    %v68 = vld [vmem:[%s1 + $0x188] sm:$0xff]
    %v69 = vld [vmem:[%s1 + $0x190] sm:$0xff]
    %v70 = vld [vmem:[%s1 + $0x198] sm:$0xff]
    %v71 = vld [vmem:[%s1 + $0x1a0] sm:$0xff]
    %v72 = vld [vmem:[%s1 + $0x1a8] sm:$0xff]
    %v73 = vld [vmem:[%s1 + $0x1b0] sm:$0xff]
    %v74 = vld [vmem:[%s1 + $0x1b8] sm:$0xff]
    %v75 = vld [vmem:[%s1 + $0x1c0] sm:$0xff]
    %v76 = vld [vmem:[%s1 + $0x1c8] sm:$0xff]
    %v77 = vld [vmem:[%s1 + $0x1d0] sm:$0xff]
    %v78 = vld [vmem:[%s1 + $0x1d8] sm:$0xff]
    %v79 = vld [vmem:[%s1 + $0x1e0] sm:$0xff]
    %v80 = vld [vmem:[%s1 + $0x1e8] sm:$0xff]
    %v81 = vld [vmem:[%s1 + $0x1f0] sm:$0xff]
    %v82 = vld [vmem:[%s1 + $0x1f8] sm:$0xff]
    %v83 = vld [vmem:[%s2] sm:$0x3]
    %v84 = vld [vmem:[%s3] sm:$0xff]
    %v85 = vld [vmem:[%s3 + $0x8] sm:$0xff]
    %v86 = vld [vmem:[%s3 + $0x10] sm:$0xff]
    %v87 = vld [vmem:[%s3 + $0x18] sm:$0xff]
    %v88 = vld [vmem:[%s3 + $0x20] sm:$0xff]
    %v89 = vld [vmem:[%s3 + $0x28] sm:$0xff]
    %v90 = vld [vmem:[%s3 + $0x30] sm:$0xff]
    %v91 = vld [vmem:[%s3 + $0x38] sm:$0xff]
    %v92 = vld [vmem:[%s3 + $0x40] sm:$0xff]
    %v93 = vld [vmem:[%s3 + $0x48] sm:$0xff]
    %v94 = vld [vmem:[%s3 + $0x50] sm:$0xff]
    %v95 = vld [vmem:[%s3 + $0x58] sm:$0xff]
    %v96 = vld [vmem:[%s3 + $0x60] sm:$0xff]
    %v97 = vld [vmem:[%s3 + $0x68] sm:$0xff]
    %v98 = vld [vmem:[%s3 + $0x70] sm:$0xff]
    %v99 = vld [vmem:[%s3 + $0x78] sm:$0xff]
    %v101 = vcombine.high %v18, %v18
    %v103 = vunpack.c.l.s4 1983009808
    %v104 = vunpack.c.0.s8 %v103
    %v105 = vlaneseq
    %v106 = vshrl.u32 %v105, 7
    %v107 = vsub.s32 %v104, %v106
    %v108 = vrot.slane %v18, %v107
    %v110 = vunpack.c.l.s4 1983009808
    %v111 = vunpack.c.0.s8 %v110
    %v112 = vlaneseq
    %v113 = vshrl.u32 %v112, 7
    %v114 = vsub.s32 %v111, %v113
    %v115 = vrot.slane %v101, %v114
    %v116 = vcombine.high %v108, %v108
    %v117 = vcombine.high %v115, %v115
    %122 = vmatprep.subr.mxu0 0.0
    %123 = vmatpush1.msra.mxu0 %v19
    %124 = vmatprep.subr.mxu0 0.0
    %125 = vmatpush1.msra.mxu0 %v20
    %126 = vmatprep.subr.mxu0 0.0
    %127 = vmatpush1.msra.mxu0 %v21
    %128 = vmatprep.subr.mxu0 0.0
    %129 = vmatpush1.msra.mxu0 %v22
    %130 = vmatprep.subr.mxu0 0.0
    %131 = vmatpush1.msra.mxu0 %v23
    %132 = vmatprep.subr.mxu0 0.0
    %133 = vmatpush1.msra.mxu0 %v24
    %134 = vmatprep.subr.mxu0 0.0
    %135 = vmatpush1.msra.mxu0 %v25
    %136 = vmatprep.subr.mxu0 0.0
    %137 = vmatpush1.msra.mxu0 %v26
    %138 = vmatprep.subr.mxu0 0.0
    %139 = vmatpush1.msra.mxu0 %v27
    %140 = vmatprep.subr.mxu0 0.0
    %141 = vmatpush1.msra.mxu0 %v28
    %142 = vmatprep.subr.mxu0 0.0
    %143 = vmatpush1.msra.mxu0 %v29
    %144 = vmatprep.subr.mxu0 0.0
    %145 = vmatpush1.msra.mxu0 %v30
    %146 = vmatprep.subr.mxu0 0.0
    %147 = vmatpush1.msra.mxu0 %v31
    %148 = vmatprep.subr.mxu0 0.0
    %149 = vmatpush1.msra.mxu0 %v32
    %150 = vmatprep.subr.mxu0 0.0
    %151 = vmatpush1.msra.mxu0 %v33
    %152 = vmatprep.subr.mxu0 0.0
    %153 = vmatpush1.msra.mxu0 %v34
    %154 = vmatprep.subr.mxu0 0.0
    %155 = vmatpush1.msra.mxu0 %v35
    %156 = vmatprep.subr.mxu0 0.0
    %157 = vmatpush1.msra.mxu0 %v36
    %158 = vmatprep.subr.mxu0 0.0
    %159 = vmatpush1.msra.mxu0 %v37
    %160 = vmatprep.subr.mxu0 0.0
    %161 = vmatpush1.msra.mxu0 %v38
    %162 = vmatprep.subr.mxu0 0.0
    %163 = vmatpush1.msra.mxu0 %v39
    %164 = vmatprep.subr.mxu0 0.0
    %165 = vmatpush1.msra.mxu0 %v40
    %166 = vmatprep.subr.mxu0 0.0
    %167 = vmatpush1.msra.mxu0 %v41
    %168 = vmatprep.subr.mxu0 0.0
    %169 = vmatpush1.msra.mxu0 %v42
    %170 = vmatprep.subr.mxu0 0.0
    %171 = vmatpush1.msra.mxu0 %v43
    %172 = vmatprep.subr.mxu0 0.0
    %173 = vmatpush1.msra.mxu0 %v44
    %174 = vmatprep.subr.mxu0 0.0
    %175 = vmatpush1.msra.mxu0 %v45
    %176 = vmatprep.subr.mxu0 0.0
    %177 = vmatpush1.msra.mxu0 %v46
    %178 = vmatprep.subr.mxu0 0.0
    %179 = vmatpush1.msra.mxu0 %v47
    %180 = vmatprep.subr.mxu0 0.0
    %181 = vmatpush1.msra.mxu0 %v48
    %182 = vmatprep.subr.mxu0 0.0
    %183 = vmatpush1.msra.mxu0 %v49
    %184 = vmatprep.subr.mxu0 0.0
    %185 = vmatpush1.msra.mxu0 %v50
    %186 = vmatprep.mubr.f32.mxu0 %v116
    %187 = vmatmul.mubr.f32.gmra.mrb[0].mxu0 %v108
    %v188 = vpop.f32.mrb[0].mxu0
    %v189 = vadd.f32 0.0, %v188
    %v190 = vpop.f32.mrb[0].mxu0
    %191 = vdwg.mxu0
    %192 = vmatprep.subr.mxu0 0.0
    %193 = vmatpush1.msra.mxu0 %v51
    %194 = vmatprep.subr.mxu0 0.0
    %195 = vmatpush1.msra.mxu0 %v52
    %196 = vmatprep.subr.mxu0 0.0
    %197 = vmatpush1.msra.mxu0 %v53
    %198 = vmatprep.subr.mxu0 0.0
    %199 = vmatpush1.msra.mxu0 %v54
    %200 = vmatprep.subr.mxu0 0.0
    %201 = vmatpush1.msra.mxu0 %v55
    %202 = vmatprep.subr.mxu0 0.0
    %203 = vmatpush1.msra.mxu0 %v56
    %204 = vmatprep.subr.mxu0 0.0
    %205 = vmatpush1.msra.mxu0 %v57
    %206 = vmatprep.subr.mxu0 0.0
    %207 = vmatpush1.msra.mxu0 %v58
    %208 = vmatprep.subr.mxu0 0.0
    %209 = vmatpush1.msra.mxu0 %v59
    %210 = vmatprep.subr.mxu0 0.0
    %211 = vmatpush1.msra.mxu0 %v60
    %212 = vmatprep.subr.mxu0 0.0
    %213 = vmatpush1.msra.mxu0 %v61
    %214 = vmatprep.subr.mxu0 0.0
    %215 = vmatpush1.msra.mxu0 %v62
    %216 = vmatprep.subr.mxu0 0.0
    %217 = vmatpush1.msra.mxu0 %v63
    %218 = vmatprep.subr.mxu0 0.0
    %219 = vmatpush1.msra.mxu0 %v64
    %220 = vmatprep.subr.mxu0 0.0
    %221 = vmatpush1.msra.mxu0 %v65
    %222 = vmatprep.subr.mxu0 0.0
    %223 = vmatpush1.msra.mxu0 %v66
    %224 = vmatprep.subr.mxu0 0.0
    %225 = vmatpush1.msra.mxu0 %v67
    %226 = vmatprep.subr.mxu0 0.0
    %227 = vmatpush1.msra.mxu0 %v68
    %228 = vmatprep.subr.mxu0 0.0
    %229 = vmatpush1.msra.mxu0 %v69
    %230 = vmatprep.subr.mxu0 0.0
    %231 = vmatpush1.msra.mxu0 %v70
    %232 = vmatprep.subr.mxu0 0.0
    %233 = vmatpush1.msra.mxu0 %v71
    %234 = vmatprep.subr.mxu0 0.0
    %235 = vmatpush1.msra.mxu0 %v72
    %236 = vmatprep.subr.mxu0 0.0
    %237 = vmatpush1.msra.mxu0 %v73
    %238 = vmatprep.subr.mxu0 0.0
    %239 = vmatpush1.msra.mxu0 %v74
    %240 = vmatprep.subr.mxu0 0.0
    %241 = vmatpush1.msra.mxu0 %v75
    %242 = vmatprep.subr.mxu0 0.0
    %243 = vmatpush1.msra.mxu0 %v76
    %244 = vmatprep.subr.mxu0 0.0
    %245 = vmatpush1.msra.mxu0 %v77
    %246 = vmatprep.subr.mxu0 0.0
    %247 = vmatpush1.msra.mxu0 %v78
    %248 = vmatprep.subr.mxu0 0.0
    %249 = vmatpush1.msra.mxu0 %v79
    %250 = vmatprep.subr.mxu0 0.0
    %251 = vmatpush1.msra.mxu0 %v80
    %252 = vmatprep.subr.mxu0 0.0
    %253 = vmatpush1.msra.mxu0 %v81
    %254 = vmatprep.subr.mxu0 0.0
    %255 = vmatpush1.msra.mxu0 %v82
    %256 = vmatprep.mubr.f32.mxu0 %v117
    %257 = vmatmul.mubr.f32.gmra.mrb[0].mxu0 %v115
    %v258 = vpop.f32.mrb[0].mxu0
    %v259 = vadd.f32 %v189, %v258
    %v260 = vpop.f32.mrb[0].mxu0
    %261 = vdwg.mxu0
    %v262 = vmax.f32 %v259, 0.0
    %vm263 = vcmask 15360
    %v265 = vsel %vm263, %v262, 0
    %vm267 = vcmask 1041408
    %v269 = vsel %vm267, %v83, 0
    %271 = vmatprep.subr.mxu0 0.0
    %272 = vmatpush1.msra.mxu0 %v269
    %273 = vmatprep.subr.mxu0 0.0
    %274 = vmatpush1.msra.mxu0 0.0
    %275 = vmatprep.subr.mxu0 0.0
    %276 = vmatpush1.msra.mxu0 0.0
    %277 = vmatprep.subr.mxu0 0.0
    %278 = vmatpush1.msra.mxu0 0.0
    %279 = vmatprep.subr.mxu0 0.0
    %280 = vmatpush1.msra.mxu0 0.0
    %281 = vmatprep.subr.mxu0 0.0
    %282 = vmatpush1.msra.mxu0 0.0
    %283 = vmatprep.subr.mxu0 0.0
    %284 = vmatpush1.msra.mxu0 0.0
    %285 = vmatprep.subr.mxu0 0.0
    %286 = vmatpush1.msra.mxu0 0.0
    %287 = vmatprep.subr.mxu0 0.0
    %288 = vmatpush1.msra.mxu0 0.0
    %289 = vmatprep.subr.mxu0 0.0
    %290 = vmatpush1.msra.mxu0 0.0
    %291 = vmatprep.subr.mxu0 0.0
    %292 = vmatpush1.msra.mxu0 0.0
    %293 = vmatprep.subr.mxu0 0.0
    %294 = vmatpush1.msra.mxu0 0.0
    %295 = vmatprep.subr.mxu0 0.0
    %296 = vmatpush1.msra.mxu0 0.0
    %297 = vmatprep.subr.mxu0 0.0
    %298 = vmatpush1.msra.mxu0 0.0
    %299 = vmatprep.subr.mxu0 0.0
    %300 = vmatpush1.msra.mxu0 0.0
    %301 = vmatprep.subr.mxu0 0.0
    %302 = vmatpush1.msra.mxu0 0.0
    %303 = vmatprep.subr.mxu0 0.0
    %304 = vmatpush1.msra.mxu0 0.0
    %305 = vmatprep.subr.mxu0 0.0
    %306 = vmatpush1.msra.mxu0 0.0
    %307 = vmatprep.subr.mxu0 0.0
    %308 = vmatpush1.msra.mxu0 0.0
    %309 = vmatprep.subr.mxu0 0.0
    %310 = vmatpush1.msra.mxu0 0.0
    %311 = vmatprep.subr.mxu0 0.0
    %312 = vmatpush1.msra.mxu0 0.0
    %313 = vmatprep.subr.mxu0 0.0
    %314 = vmatpush1.msra.mxu0 0.0
    %315 = vmatprep.subr.mxu0 0.0
    %316 = vmatpush1.msra.mxu0 0.0
    %317 = vmatprep.subr.mxu0 0.0
    %318 = vmatpush1.msra.mxu0 0.0
    %319 = vmatprep.subr.mxu0 0.0
    %320 = vmatpush1.msra.mxu0 0.0
    %321 = vmatprep.subr.mxu0 0.0
    %322 = vmatpush1.msra.mxu0 0.0
    %323 = vmatprep.subr.mxu0 0.0
    %324 = vmatpush1.msra.mxu0 0.0
    %325 = vmatprep.subr.mxu0 0.0
    %326 = vmatpush1.msra.mxu0 0.0
    %327 = vmatprep.subr.mxu0 0.0
    %328 = vmatpush1.msra.mxu0 0.0
    %329 = vmatprep.subr.mxu0 0.0
    %330 = vmatpush1.msra.mxu0 0.0
    %331 = vmatprep.subr.mxu0 0.0
    %332 = vmatpush1.msra.mxu0 0.0
    %333 = vmatprep.subr.mxu0 0.0
    %334 = vmatpush1.msra.mxu0 0.0
    %335 = vmatprep.mubr.f32.mxu0 0.0
    %336 = vmatmul.mubr.f32.gmra.mrb[0].mxu0 %v265
    %v337 = vpop.f32.mrb[0].mxu0
    %v338 = vadd.f32 0.0, %v337
    %v339 = vpop.f32.mrb[0].mxu0
    %340 = vdwg.mxu0
    %v341 = vxor.u32 %v338, 2147483648
    %v342 = vmul.f32 %v341, 1.442695
    %v343 = vpow.pop %v342
    %v344 = vadd.f32 %v343, 1.0
    %v345 = vrcp.pop %v344
    %v346 = vmul.f32 1.0, %v345
    %vm347 = vcmask 261120
    %v349 = vsel %vm347, %v346, 0
    %351 = vmatprep.subr.mxu0 %v85
    %352 = vmatpush1.msra.mxu0 %v84
    %353 = vmatprep.subr.mxu0 %v89
    %354 = vmatpush1.msra.mxu0 %v88
    %355 = vmatprep.subr.mxu0 %v93
    %356 = vmatpush1.msra.mxu0 %v92
    %357 = vmatprep.subr.mxu0 %v97
    %358 = vmatpush1.msra.mxu0 %v96
    %359 = vmatprep.subr.mxu0 0.0
    %360 = vmatpush1.msra.mxu0 0.0
    %361 = vmatprep.subr.mxu0 0.0
    %362 = vmatpush1.msra.mxu0 0.0
    %363 = vmatprep.subr.mxu0 0.0
    %364 = vmatpush1.msra.mxu0 0.0
    %365 = vmatprep.subr.mxu0 0.0
    %366 = vmatpush1.msra.mxu0 0.0
    %367 = vmatprep.subr.mxu0 0.0
    %368 = vmatpush1.msra.mxu0 0.0
    %369 = vmatprep.subr.mxu0 0.0
    %370 = vmatpush1.msra.mxu0 0.0
    %371 = vmatprep.subr.mxu0 0.0
    %372 = vmatpush1.msra.mxu0 0.0
    %373 = vmatprep.subr.mxu0 0.0
    %374 = vmatpush1.msra.mxu0 0.0
    %375 = vmatprep.subr.mxu0 0.0
    %376 = vmatpush1.msra.mxu0 0.0
    %377 = vmatprep.subr.mxu0 0.0
    %378 = vmatpush1.msra.mxu0 0.0
    %379 = vmatprep.subr.mxu0 0.0
    %380 = vmatpush1.msra.mxu0 0.0
    %381 = vmatprep.subr.mxu0 0.0
    %382 = vmatpush1.msra.mxu0 0.0
    %383 = vmatprep.subr.mxu0 0.0
    %384 = vmatpush1.msra.mxu0 0.0
    %385 = vmatprep.subr.mxu0 0.0
    %386 = vmatpush1.msra.mxu0 0.0
    %387 = vmatprep.subr.mxu0 0.0
    %388 = vmatpush1.msra.mxu0 0.0
    %389 = vmatprep.subr.mxu0 0.0
    %390 = vmatpush1.msra.mxu0 0.0
    %391 = vmatprep.subr.mxu0 0.0
    %392 = vmatpush1.msra.mxu0 0.0
    %393 = vmatprep.subr.mxu0 0.0
    %394 = vmatpush1.msra.mxu0 0.0
    %395 = vmatprep.subr.mxu0 0.0
    %396 = vmatpush1.msra.mxu0 0.0
    %397 = vmatprep.subr.mxu0 0.0
    %398 = vmatpush1.msra.mxu0 0.0
    %399 = vmatprep.subr.mxu0 0.0
    %400 = vmatpush1.msra.mxu0 0.0
    %401 = vmatprep.subr.mxu0 0.0
    %402 = vmatpush1.msra.mxu0 0.0
    %403 = vmatprep.subr.mxu0 0.0
    %404 = vmatpush1.msra.mxu0 0.0
    %405 = vmatprep.subr.mxu0 0.0
    %406 = vmatpush1.msra.mxu0 0.0
    %407 = vmatprep.subr.mxu0 0.0
    %408 = vmatpush1.msra.mxu0 0.0
    %409 = vmatprep.subr.mxu0 0.0
    %410 = vmatpush1.msra.mxu0 0.0
    %411 = vmatprep.subr.mxu0 0.0
    %412 = vmatpush1.msra.mxu0 0.0
    %413 = vmatprep.subr.mxu0 0.0
    %414 = vmatpush1.msra.mxu0 0.0
    %415 = vmatprep.mubr.f32.mxu0 0.0
    %416 = vmatmul.mubr.f32.gmra.mrb[0].mxu0 %v349
    %v417 = vpop.f32.mrb[0].mxu0
    %v418 = vadd.f32 0.0, %v417
    %v419 = vpop.f32.mrb[0].mxu0
    %v420 = vadd.f32 0.0, %v419
    %421 = vdwg.mxu0
    %422 = vmatprep.subr.mxu0 %v87
    %423 = vmatpush1.msra.mxu0 %v86
    %424 = vmatprep.subr.mxu0 %v91
    %425 = vmatpush1.msra.mxu0 %v90
    %426 = vmatprep.subr.mxu0 %v95
    %427 = vmatpush1.msra.mxu0 %v94
    %428 = vmatprep.subr.mxu0 %v99
    %429 = vmatpush1.msra.mxu0 %v98
    %430 = vmatprep.subr.mxu0 0.0
    %431 = vmatpush1.msra.mxu0 0.0
    %432 = vmatprep.subr.mxu0 0.0
    %433 = vmatpush1.msra.mxu0 0.0
    %434 = vmatprep.subr.mxu0 0.0
    %435 = vmatpush1.msra.mxu0 0.0
    %436 = vmatprep.subr.mxu0 0.0
    %437 = vmatpush1.msra.mxu0 0.0
    %438 = vmatprep.subr.mxu0 0.0
    %439 = vmatpush1.msra.mxu0 0.0
    %440 = vmatprep.subr.mxu0 0.0
    %441 = vmatpush1.msra.mxu0 0.0
    %442 = vmatprep.subr.mxu0 0.0
    %443 = vmatpush1.msra.mxu0 0.0
    %444 = vmatprep.subr.mxu0 0.0
    %445 = vmatpush1.msra.mxu0 0.0
    %446 = vmatprep.subr.mxu0 0.0
    %447 = vmatpush1.msra.mxu0 0.0
    %448 = vmatprep.subr.mxu0 0.0
    %449 = vmatpush1.msra.mxu0 0.0
    %450 = vmatprep.subr.mxu0 0.0
    %451 = vmatpush1.msra.mxu0 0.0
    %452 = vmatprep.subr.mxu0 0.0
    %453 = vmatpush1.msra.mxu0 0.0
    %454 = vmatprep.subr.mxu0 0.0
    %455 = vmatpush1.msra.mxu0 0.0
    %456 = vmatprep.subr.mxu0 0.0
    %457 = vmatpush1.msra.mxu0 0.0
    %458 = vmatprep.subr.mxu0 0.0
    %459 = vmatpush1.msra.mxu0 0.0
    %460 = vmatprep.subr.mxu0 0.0
    %461 = vmatpush1.msra.mxu0 0.0
    %462 = vmatprep.subr.mxu0 0.0
    %463 = vmatpush1.msra.mxu0 0.0
    %464 = vmatprep.subr.mxu0 0.0
    %465 = vmatpush1.msra.mxu0 0.0
    %466 = vmatprep.subr.mxu0 0.0
    %467 = vmatpush1.msra.mxu0 0.0
    %468 = vmatprep.subr.mxu0 0.0
    %469 = vmatpush1.msra.mxu0 0.0
    %470 = vmatprep.subr.mxu0 0.0
    %471 = vmatpush1.msra.mxu0 0.0
    %472 = vmatprep.subr.mxu0 0.0
    %473 = vmatpush1.msra.mxu0 0.0
    %474 = vmatprep.subr.mxu0 0.0
    %475 = vmatpush1.msra.mxu0 0.0
    %476 = vmatprep.subr.mxu0 0.0
    %477 = vmatpush1.msra.mxu0 0.0
    %478 = vmatprep.subr.mxu0 0.0
    %479 = vmatpush1.msra.mxu0 0.0
    %480 = vmatprep.subr.mxu0 0.0
    %481 = vmatpush1.msra.mxu0 0.0
    %482 = vmatprep.subr.mxu0 0.0
    %483 = vmatpush1.msra.mxu0 0.0
    %484 = vmatprep.subr.mxu0 0.0
    %485 = vmatpush1.msra.mxu0 0.0
    %486 = vmatprep.mubr.f32.mxu0 0.0
    %487 = vmatmul.mubr.f32.gmra.mrb[0].mxu0 %v349
    %v488 = vpop.f32.mrb[0].mxu0
    %v489 = vadd.f32 0.0, %v488
    %v490 = vpop.f32.mrb[0].mxu0
    %v491 = vadd.f32 0.0, %v490
    %492 = vdwg.mxu0
    %v497 = vcombine.low %v418, %v420
    %v498 = vcombine.low %v489, %v491
    %v500 = vunpack.c.l.s4 1983009808
    %v501 = vunpack.c.0.s8 %v500
    %v502 = vlaneseq
    %v503 = vshrl.u32 %v502, 7
    %v504 = vsub.s32 %v501, %v503
    %v505 = vrot.slane %v497, %v504
    %v507 = vunpack.c.l.s4 1983009808
    %v508 = vunpack.c.0.s8 %v507
    %v509 = vlaneseq
    %v510 = vshrl.u32 %v509, 7
    %v511 = vsub.s32 %v508, %v510
    %v512 = vrot.slane %v498, %v511
    %v513 = vcombine.low %v505, %v512
    %v515 = vmul.f32 %v18, %v513
    %516 = vst [vmem:[#allocation2] sm:$0xff] %v515
    // Predicated region
    $region18: #{tpu_custom_call.1} parent=1 // pred_check
      _
    $region19: #{tpu_custom_call.1} parent=1 // pred_check_branch
      %518 = sbr.rel (0) target = $region21
    $region20: #{tpu_custom_call.1} parent=1 // pred_region
      %s520 = ssub.s32 128, 128
      %521 = vsyncadd [#allocation3], %s520
      %s523 = sshll.u32 [#allocation2], 4
      %s524 = int_to_ptr.vmem [resolvable:$true] %s523
      %526 = dma.vmem_to_hbm [thread:$0]  %s524, 128, %s4, [#allocation3]
    $region21: #{tpu_custom_call.1} parent=1 // pred_fallthru
      _
    // Predicated region
    $region22: #{tpu_custom_call.1} parent=1 // pred_check
      _
    $region23: #{tpu_custom_call.1} parent=1 // pred_check_branch
      %528 = sbr.rel (0) target = $region25
    $region24: #{tpu_custom_call.1} parent=1 // pred_region
      %529 = dma.done [#allocation3], 128
    $region25: #{tpu_custom_call.1} parent=1 // pred_fallthru
      _
    %530 = vsyncpa [#allocation3], 1

</llo_original>
